<compile_context>
chip_gen: v5e
topology: v5e:2x2
jax: 0.10.0
libtpu: 0.0.40
codegen_flags: <defaults>
</compile_context>

<pallas_src>
import functools

import jax
import jax.numpy as jnp
from jax.experimental import pallas as pl
from jax.experimental.pallas import tpu as pltpu

LANE = 128          # vreg lane width
SUBLANE_ALIGN = 16  # safe sublane multiple for bf16-packed intermediates


def _round_up(x, m):
    return (x + m - 1) // m * m


def _policy_kernel(x_ref, we_ref, be_ref, wpv_ref, out_ref, *, a_real):
    """One batch tile: embedder + fused policy/value head + log_softmax.

    x_ref:   (TB, in_pad)   f32    (cast to bf16 in-kernel, free under MXU)
    we_ref:  (in_pad, Dp)   bf16   (embedder weight, zero-padded rows/cols)
    be_ref:  (1, Dp)        f32    (embedder bias; column d holds 1.0 so the
                                    relu output carries a ones lane for the
                                    fused head bias)
    wpv_ref: (Dp, Np)       bf16   (fused [policy | value] weight; row d
                                    carries the head biases)
    out_ref: (TB, Np)       f32    lanes [0, A): log_probs, lane A: value
    """
    # ---- Embedder: hidden = relu(x @ We + be), f32 accumulation on MXU ----
    xb = x_ref[...].astype(we_ref.dtype)                       # bf16, in-kernel
    h = jnp.dot(xb, we_ref[...], preferred_element_type=jnp.float32)
    h = jnp.maximum(h + be_ref[...], 0.0)                      # (TB, Dp) f32
    # Column d of We is zero and be[0, d] == 1.0, so h[:, d] == 1.0 and row d
    # of wpv acts as the fused policy/value bias -- no in-kernel fixup needed.

    # ---- Fused policy + value head: one lane-dense 128-wide matmul ----
    fused = jnp.dot(h.astype(wpv_ref.dtype), wpv_ref[...],
                    preferred_element_type=jnp.float32)        # (TB, Np) f32

    # ---- log_softmax over the A real action lanes only ----
    lane = jax.lax.broadcasted_iota(jnp.int32, fused.shape, 1)
    is_logit = lane < a_real
    masked = jnp.where(is_logit, fused, -jnp.inf)
    m = jnp.max(masked, axis=-1, keepdims=True)
    shifted = masked - m
    lse = jnp.log(jnp.sum(jnp.exp(shifted), axis=-1, keepdims=True))
    logp = shifted - lse

    # Lanes [0, A): normalized log-probs; lane A keeps the raw value output;
    # remaining padded lanes keep the (finite) fused values.  Single unmasked
    # lane-dense store.
    out_ref[...] = jnp.where(is_logit, logp, fused)


def prepare_params(params, action_size, compute_dtype=jnp.bfloat16):
    """Pad / fuse the module parameters once (outside the hot path)."""
    we, be, wp, bp, wv, bv = (params[k] for k in
                              ("we", "be", "wp", "bp", "wv", "bv"))
    in_flat, d = we.shape
    a = action_size
    in_pad = _round_up(in_flat, LANE)  # keep MXU K dim lane-aligned
    d_pad = _round_up(d + 1, LANE)     # +1 spare lane carries the head biases
    n_pad = _round_up(a + 1, LANE)     # lanes [0, a): logits, lane a: value

    we_p = jnp.zeros((in_pad, d_pad), jnp.float32).at[:in_flat, :d].set(we)
    # Bias lane trick: We column d is all-zero, so setting be[0, d] = 1.0
    # makes relu(x @ We + be)[:, d] == 1.0 exactly -> fused-head bias row.
    be_p = jnp.zeros((1, d_pad), jnp.float32).at[:, :d].set(be.reshape(1, d))
    be_p = be_p.at[0, d].set(1.0)

    wpv = jnp.zeros((d_pad, n_pad), jnp.float32)
    wpv = wpv.at[:d, :a].set(wp)                  # policy weight
    wpv = wpv.at[:d, a:a + 1].set(wv)             # value weight
    wpv = wpv.at[d, :a].set(bp.reshape(a))        # policy bias (ones lane)
    wpv = wpv.at[d, a:a + 1].set(bv.reshape(1))   # value bias  (ones lane)

    return dict(
        we=we_p.astype(compute_dtype),
        be=be_p,                                  # stays f32 (post-MXU add)
        wpv=wpv.astype(compute_dtype),
        action_size=int(a),
        in_flat=int(in_flat),
        in_pad=int(in_pad),
    )


def categorical_policy_forward(x, prepared):
    """x: (B, C, H, W) float32.  Returns (log_probs (B, A), v (B,))."""
    we_p, be_p, wpv = prepared["we"], prepared["be"], prepared["wpv"]
    a = prepared["action_size"]
    in_flat = prepared["in_flat"]
    in_pad = prepared["in_pad"]
    d_pad = wpv.shape[0]
    n_pad = wpv.shape[1]

    B = x.shape[0]
    x_flat = x.reshape(B, -1)
    assert x_flat.shape[1] == in_flat

    # Pre-pad the feature axis only when needed (layout plumbing, not compute).
    if in_pad != in_flat:
        x_flat = jnp.pad(x_flat, ((0, 0), (0, in_pad - in_flat)))

    # Batch tiling: >=4 grid steps for large B (so v7x's 2 TCs both get work
    # and DMA/compute stay pipelined per core), capped at 512 rows per tile.
    tb = min(512, _round_up(max((B + 3) // 4, 1), SUBLANE_ALIGN))
    b_pad = _round_up(B, tb)
    if b_pad != B:
        x_flat = jnp.pad(x_flat, ((0, b_pad - B), (0, 0)))
    # NOTE: x stays f32 here; the bf16 cast happens inside the kernel so the
    # dominant HBM stream is read exactly once.

    grid = (b_pad // tb,)

    kernel = functools.partial(_policy_kernel, a_real=a)

    cost = pl.CostEstimate(
        flops=2 * b_pad * in_pad * d_pad + 2 * b_pad * d_pad * n_pad,
        transcendentals=b_pad * n_pad,
        bytes_accessed=(b_pad * in_pad * 4       # x (f32, read once)
                        + in_pad * d_pad * 2     # We (bf16)
                        + d_pad * n_pad * 2      # Wpv (bf16)
                        + d_pad * 4              # be (f32)
                        + b_pad * n_pad * 4),    # output slab (f32)
    )

    slab = pl.pallas_call(
        kernel,
        out_shape=jax.ShapeDtypeStruct((b_pad, n_pad), jnp.float32),
        grid_spec=pltpu.PrefetchScalarGridSpec(
            num_scalar_prefetch=0,
            grid=grid,
            in_specs=[
                pl.BlockSpec((tb, in_pad), lambda i: (i, 0)),        # x tile
                pl.BlockSpec((in_pad, d_pad), lambda i: (0, 0)),     # We resident
                pl.BlockSpec((1, d_pad), lambda i: (0, 0)),          # be resident
                pl.BlockSpec((d_pad, n_pad), lambda i: (0, 0)),      # Wpv resident
            ],
            out_specs=pl.BlockSpec((tb, n_pad), lambda i: (i, 0)),
        ),
        compiler_params=pltpu.CompilerParams(
            dimension_semantics=("parallel",),
            vmem_limit_bytes=24 * 1024 * 1024),
        cost_estimate=cost,
    )(x_flat, we_p, be_p, wpv)

    log_probs = slab[:B, :a]
    v = slab[:B, a]
    # TODO(synk): for the tiny-B acting path, weight re-DMA dominates; keep
    # We/Wpv VMEM-resident across calls (cross-pallas_call future, P10) or
    # batch multiple environment steps per invocation.
    return log_probs, v


def make_params(key, in_flat, hidden_dim, action_size):
    """Deterministic synthetic parameters matching the reference module.

    fc_policy / fc_value use orthogonal init with gains 0.01 / 1.0 and zero
    bias (orthogonal_init in the reference).  The embedder Linear uses a
    small deterministic normal init.  Weights stored as (in, out).
    """
    k_we, k_wp, k_wv = jax.random.split(key, 3)
    orth = jax.nn.initializers.orthogonal

    we = 0.05 * jax.random.normal(k_we, (in_flat, hidden_dim), jnp.float32)
    be = jnp.zeros((1, hidden_dim), jnp.float32)

    wp = orth(scale=0.01)(k_wp, (hidden_dim, action_size), jnp.float32)
    bp = jnp.zeros((1, action_size), jnp.float32)

    wv = orth(scale=1.0)(k_wv, (hidden_dim, 1), jnp.float32)
    bv = jnp.zeros((1, 1), jnp.float32)

    return dict(we=we, be=be, wp=wp, bp=bp, wv=wv, bv=bv)


if __name__ == "__main__":
    B, C, H, W = 2, 4, 16, 16      # small NCHW observation
    hidden_dim = 32                # embedder.output_dim
    action_size = 15               # categorical action count

    key = jax.random.PRNGKey(0)
    k_x, k_p = jax.random.split(key)
    x = jax.random.normal(k_x, (B, C, H, W), jnp.float32)
    params = make_params(k_p, C * H * W, hidden_dim, action_size)
    prepared = prepare_params(params, action_size)

    fwd = jax.jit(functools.partial(categorical_policy_forward,
                                    prepared=prepared))
    log_probs, v = fwd(x)
    jax.block_until_ready((log_probs, v))

    # Shape / normalization sanity (Categorical logits must be normalized).
    assert log_probs.shape == (B, action_size)
    assert v.shape == (B,)
    assert jnp.allclose(jnp.exp(log_probs).sum(axis=1), 1.0, atol=1e-5)

    # Cross-check against a pure-JAX f32 reference (generous tol: bf16 MXU).
    x_flat = x.reshape(B, -1)
    h_ref = jnp.maximum(x_flat @ params["we"] + params["be"], 0.0)
    logits_ref = h_ref @ params["wp"] + params["bp"]
    logp_ref = jax.nn.log_softmax(logits_ref, axis=1)
    v_ref = (h_ref @ params["wv"] + params["bv"]).reshape(-1)
    assert jnp.allclose(log_probs, logp_ref, rtol=5e-2, atol=5e-2)
    assert jnp.allclose(v, v_ref, rtol=5e-2, atol=5e-2)

    # TODO(synk): torch.distributions.Categorical object itself is returned
    # as its normalized log-probs; sampling/entropy live outside the kernel.
    print("KERNEL_OK")
</pallas_src>

<mosaic_0001>
module attributes {stable_mosaic.version = 11 : i64} {
  func.func @_policy_kernel(%arg0: i32, %arg1: memref<16x1024xf32, #tpu.memory_space<vmem>>, %arg2: memref<1024x128xbf16, #tpu.memory_space<vmem>>, %arg3: memref<1x128xf32, #tpu.memory_space<vmem>>, %arg4: memref<128x128xbf16, #tpu.memory_space<vmem>>, %arg5: memref<16x128xf32, #tpu.memory_space<vmem>>) attributes {dimension_semantics = [#tpu.dimension_semantics<parallel>], iteration_bounds = array<i64: 1>, scalar_prefetch = 0 : i64, scratch_operands = 0 : i64, tpu.core_type = #tpu.core_type<tc>, window_params = [{transform_indices = @transform_0, window_bounds = array<i64: 16, 1024>}, {pipeline_mode = #tpu.pipeline_mode<synchronous>, transform_indices = @transform_1, window_bounds = array<i64: 1024, 128>}, {pipeline_mode = #tpu.pipeline_mode<synchronous>, transform_indices = @transform_2, window_bounds = array<i64: 1, 128>}, {pipeline_mode = #tpu.pipeline_mode<synchronous>, transform_indices = @transform_3, window_bounds = array<i64: 128, 128>}, {transform_indices = @transform_4, window_bounds = array<i64: 16, 128>}]} {
    %c0 = arith.constant 0 : index
    %c0_0 = arith.constant 0 : index
    %0 = vector.load %arg1[%c0, %c0_0] : memref<16x1024xf32, #tpu.memory_space<vmem>>, vector<16x1024xf32>
    %1 = arith.truncf %0 : vector<16x1024xf32> to vector<16x1024xbf16>
    %c0_1 = arith.constant 0 : index
    %c0_2 = arith.constant 0 : index
    %2 = vector.load %arg2[%c0_1, %c0_2] : memref<1024x128xbf16, #tpu.memory_space<vmem>>, vector<1024x128xbf16>
    %cst = arith.constant dense<0.000000e+00> : vector<16x128xf32>
    %3 = tpu.matmul %1, %2, %cst {dimension_numbers = #tpu.dot_dimension_numbers<[1], [0], [0], [1], [0, 0, 1, 1], [], []>} : vector<16x1024xbf16>, vector<1024x128xbf16>, vector<16x128xf32> -> vector<16x128xf32>
    %c0_3 = arith.constant 0 : index
    %c0_4 = arith.constant 0 : index
    %4 = vector.load %arg3[%c0_3, %c0_4] : memref<1x128xf32, #tpu.memory_space<vmem>>, vector<1x128xf32>
    %5 = vector.broadcast %4 : vector<1x128xf32> to vector<16x128xf32>
    %6 = arith.addf %3, %5 : vector<16x128xf32>
    %cst_5 = arith.constant 0.000000e+00 : f32
    %7 = vector.broadcast %cst_5 : f32 to vector<16x128xf32>
    %8 = arith.maximumf %6, %7 : vector<16x128xf32>
    %9 = arith.truncf %8 : vector<16x128xf32> to vector<16x128xbf16>
    %c0_6 = arith.constant 0 : index
    %c0_7 = arith.constant 0 : index
    %10 = vector.load %arg4[%c0_6, %c0_7] : memref<128x128xbf16, #tpu.memory_space<vmem>>, vector<128x128xbf16>
    %cst_8 = arith.constant dense<0.000000e+00> : vector<16x128xf32>
    %11 = tpu.matmul %9, %10, %cst_8 {dimension_numbers = #tpu.dot_dimension_numbers<[1], [0], [0], [1], [0, 0, 1, 1], [], []>} : vector<16x128xbf16>, vector<128x128xbf16>, vector<16x128xf32> -> vector<16x128xf32>
    %12 = tpu.iota {dimensions = array<i32: 1>} : vector<16x128xi32>
    %c15_i32 = arith.constant 15 : i32
    %13 = vector.broadcast %c15_i32 : i32 to vector<16x128xi32>
    %14 = arith.cmpi slt, %12, %13 : vector<16x128xi32>
    %cst_9 = arith.constant 0xFF800000 : f32
    %15 = vector.broadcast %cst_9 : f32 to vector<16x128xf32>
    %16 = arith.select %14, %11, %15 : vector<16x128xi1>, vector<16x128xf32>
    %cst_10 = arith.constant dense<0xFF800000> : vector<16xf32>
    %17 = vector.multi_reduction <maximumf>, %16, %cst_10 [1] : vector<16x128xf32> to vector<16xf32>
    %18 = vector.shape_cast %17 : vector<16xf32> to vector<16x1xf32>
    %19 = vector.broadcast %18 : vector<16x1xf32> to vector<16x128xf32>
    %20 = arith.subf %16, %19 : vector<16x128xf32>
    %21 = math.exp %20 : vector<16x128xf32>
    %cst_11 = arith.constant dense<0.000000e+00> : vector<16xf32>
    %22 = vector.multi_reduction <add>, %21, %cst_11 [1] : vector<16x128xf32> to vector<16xf32>
    %23 = vector.shape_cast %22 : vector<16xf32> to vector<16x1xf32>
    %24 = math.log %23 : vector<16x1xf32>
    %25 = vector.broadcast %24 : vector<16x1xf32> to vector<16x128xf32>
    %26 = arith.subf %20, %25 : vector<16x128xf32>
    %27 = arith.select %14, %26, %11 : vector<16x128xi1>, vector<16x128xf32>
    %c0_12 = arith.constant 0 : index
    %c0_13 = arith.constant 0 : index
    %28 = vector.load %arg5[%c0_12, %c0_13] : memref<16x128xf32, #tpu.memory_space<vmem>>, vector<16x128xf32>
    tpu.vector_store %arg5[%c0_12, %c0_13], %27 {strides = array<i32>} : memref<16x128xf32, #tpu.memory_space<vmem>>, vector<16x128xf32>,
    return
  }
  func.func @transform_0(%arg0: i32) -> (i32, i32) {
    %c0_i32 = arith.constant 0 : i32
    %c0_i32_0 = arith.constant 0 : i32
    return %arg0, %c0_i32 : i32, i32
  }
  func.func @transform_1(%arg0: i32) -> (i32, i32) {
    %c0_i32 = arith.constant 0 : i32
    %c0_i32_0 = arith.constant 0 : i32
    %c0_i32_1 = arith.constant 0 : i32
    return %c0_i32, %c0_i32_0 : i32, i32
  }
  func.func @transform_2(%arg0: i32) -> (i32, i32) {
    %c0_i32 = arith.constant 0 : i32
    %c0_i32_0 = arith.constant 0 : i32
    %c0_i32_1 = arith.constant 0 : i32
    return %c0_i32, %c0_i32_0 : i32, i32
  }
  func.func @transform_3(%arg0: i32) -> (i32, i32) {
    %c0_i32 = arith.constant 0 : i32
    %c0_i32_0 = arith.constant 0 : i32
    %c0_i32_1 = arith.constant 0 : i32
    return %c0_i32, %c0_i32_0 : i32, i32
  }
  func.func @transform_4(%arg0: i32) -> (i32, i32) {
    %c0_i32 = arith.constant 0 : i32
    %c0_i32_0 = arith.constant 0 : i32
    return %arg0, %c0_i32 : i32, i32
  }
}

</mosaic_0001>

<llo_original>
// kernel: categorical_policy_forward.1
$region0: #{categorical_policy_forward.1}
  #allocation0 [shape = 'u32[]', space=smem, size = 0x4, offset = 0x4, fixed_abs, tag = 'smem constant byte address 0x4 - core index']
  #allocation1 [shape = 'u32[72,128]{1,0:T(1,128)}', space=vmem, size = 0x9000, scoped, tag = 'internal scratch']
  %s0 = inlined_call_operand.vmem [shape: f32[16,1024], index: 0, kind: input, shape index: {}]
  %s1 = inlined_call_operand.hbm [shape: bf16[1024,128], index: 1, kind: input, shape index: {}]
  %s2 = inlined_call_operand.vmem [shape: f32[1,128], index: 2, kind: input, shape index: {}]
  %s3 = inlined_call_operand.vmem [shape: bf16[128,128], index: 3, kind: input, shape index: {}]
  %s4 = inlined_call_operand.vmem [shape: f32[16,128], index: 4, kind: output, shape index: {}]
  %s5 = sld [smem:[#allocation0]]
  $region30: #{categorical_policy_forward.1} parent=0
    _
  %s7 = ssub.s32 1, %s5
  %s8 = scalar_select 0, %s7, %s5
  $region1: #{categorical_policy_forward.1} parent=0
    #allocation2 [shape = 'u8[262144]{0}', space=vmem, size = 0x40000, scoped, tag = 'input window, operand 1, single buffered']
    #allocation3 [shape = 's32[1]{0}', space=sflag, size = 0x4, scoped, tag = 'scoped memory for categorical_policy_forward.1']
    %9 = vsyncpa [#allocation3], 0
    // Predicated region
    $region2: #{categorical_policy_forward.1} parent=1 // pred_check
      _
    $region3: #{categorical_policy_forward.1} parent=1 // pred_check_branch
      %11 = sbr.rel (0) target = $region5
    $region4: #{categorical_policy_forward.1} parent=1 // pred_region
      _
    $region5: #{categorical_policy_forward.1} parent=1 // pred_fallthru
      _
    // Predicated region
    $region6: #{categorical_policy_forward.1} parent=1 // pred_check
      _
    $region7: #{categorical_policy_forward.1} parent=1 // pred_check_branch
      %13 = sbr.rel (0) target = $region9
    $region8: #{categorical_policy_forward.1} parent=1 // pred_region
      %15 = vsyncadd [#allocation3], 0
      %s16 = sshll.u32 %s1, 4
      %s17 = int_to_ptr.hbm [resolvable:$true] %s16
      %s18 = sshll.u32 [#allocation2], 4
      %s19 = int_to_ptr.vmem [resolvable:$true] %s18
      %24 = dma.hbm_to_vmem [thread:$0]  %s17, 8192, %s19, [#allocation3], 64, 64, 4
    $region9: #{categorical_policy_forward.1} parent=1 // pred_fallthru
      _
    // Predicated region
    $region10: #{categorical_policy_forward.1} parent=1 // pred_check
      _
    $region11: #{categorical_policy_forward.1} parent=1 // pred_check_branch
      %26 = sbr.rel (0) target = $region13
    $region12: #{categorical_policy_forward.1} parent=1 // pred_region
      _
    $region13: #{categorical_policy_forward.1} parent=1 // pred_fallthru
      _
    // Predicated region
    $region14: #{categorical_policy_forward.1} parent=1 // pred_check
      _
    $region15: #{categorical_policy_forward.1} parent=1 // pred_check_branch
      %28 = sbr.rel (0) target = $region17
    $region16: #{categorical_policy_forward.1} parent=1 // pred_region
      _
    $region17: #{categorical_policy_forward.1} parent=1 // pred_fallthru
      _
    // Predicated region
    $region18: #{categorical_policy_forward.1} parent=1 // pred_check
      _
    $region19: #{categorical_policy_forward.1} parent=1 // pred_check_branch
      %30 = sbr.rel (0) target = $region21
    $region20: #{categorical_policy_forward.1} parent=1 // pred_region
      %32 = dma.done [#allocation3], 8192
    $region21: #{categorical_policy_forward.1} parent=1 // pred_fallthru
      _
    %v33 = vld [vmem:[%s0] sm:$0xff]
    %v34 = vld [vmem:[%s0 + $0x8] sm:$0xff]
    %v35 = vld [vmem:[%s0 + $0x10] sm:$0xff]
    %v36 = vld [vmem:[%s0 + $0x18] sm:$0xff]
    %v37 = vld [vmem:[%s0 + $0x20] sm:$0xff]
    %v38 = vld [vmem:[%s0 + $0x28] sm:$0xff]
    %v39 = vld [vmem:[%s0 + $0x30] sm:$0xff]
    %v40 = vld [vmem:[%s0 + $0x38] sm:$0xff]
    %v41 = vld [vmem:[%s0 + $0x40] sm:$0xff]
    %v42 = vld [vmem:[%s0 + $0x48] sm:$0xff]
    %v43 = vld [vmem:[%s0 + $0x50] sm:$0xff]
    %v44 = vld [vmem:[%s0 + $0x58] sm:$0xff]
    %v45 = vld [vmem:[%s0 + $0x60] sm:$0xff]
    %v46 = vld [vmem:[%s0 + $0x68] sm:$0xff]
    %v47 = vld [vmem:[%s0 + $0x70] sm:$0xff]
    %v48 = vld [vmem:[%s0 + $0x78] sm:$0xff]
    %v49 = vpack.c.bf16 %v41, %v33
    %v50 = vpack.c.bf16 %v42, %v34
    %v51 = vpack.c.bf16 %v43, %v35
    %v52 = vpack.c.bf16 %v44, %v36
    %v53 = vpack.c.bf16 %v45, %v37
    %v54 = vpack.c.bf16 %v46, %v38
    %v55 = vpack.c.bf16 %v47, %v39
    %v56 = vpack.c.bf16 %v48, %v40
    %v57 = vld [vmem:[#allocation2] sm:$0xf]
    %v58 = vld [vmem:[#allocation2 + $0x4] sm:$0xf]
    %v59 = vld [vmem:[#allocation2 + $0x8] sm:$0xf]
    %v60 = vld [vmem:[#allocation2 + $0xc] sm:$0xf]
    %v61 = vld [vmem:[#allocation2 + $0x10] sm:$0xf]
    %v62 = vld [vmem:[#allocation2 + $0x14] sm:$0xf]
    %v63 = vld [vmem:[#allocation2 + $0x18] sm:$0xf]
    %v64 = vld [vmem:[#allocation2 + $0x1c] sm:$0xf]
    %v65 = vld [vmem:[#allocation2 + $0x20] sm:$0xf]
    %v66 = vld [vmem:[#allocation2 + $0x24] sm:$0xf]
    %v67 = vld [vmem:[#allocation2 + $0x28] sm:$0xf]
    %v68 = vld [vmem:[#allocation2 + $0x2c] sm:$0xf]
    %v69 = vld [vmem:[#allocation2 + $0x30] sm:$0xf]
    %v70 = vld [vmem:[#allocation2 + $0x34] sm:$0xf]
    %v71 = vld [vmem:[#allocation2 + $0x38] sm:$0xf]
    %v72 = vld [vmem:[#allocation2 + $0x3c] sm:$0xf]
    %v73 = vld [vmem:[#allocation2 + $0x40] sm:$0xf]
    %v74 = vld [vmem:[#allocation2 + $0x44] sm:$0xf]
    %v75 = vld [vmem:[#allocation2 + $0x48] sm:$0xf]
    %v76 = vld [vmem:[#allocation2 + $0x4c] sm:$0xf]
    %v77 = vld [vmem:[#allocation2 + $0x50] sm:$0xf]
    %v78 = vld [vmem:[#allocation2 + $0x54] sm:$0xf]
    %v79 = vld [vmem:[#allocation2 + $0x58] sm:$0xf]
    %v80 = vld [vmem:[#allocation2 + $0x5c] sm:$0xf]
    %v81 = vld [vmem:[#allocation2 + $0x60] sm:$0xf]
    %v82 = vld [vmem:[#allocation2 + $0x64] sm:$0xf]
    %v83 = vld [vmem:[#allocation2 + $0x68] sm:$0xf]
    %v84 = vld [vmem:[#allocation2 + $0x6c] sm:$0xf]
    %v85 = vld [vmem:[#allocation2 + $0x70] sm:$0xf]
    %v86 = vld [vmem:[#allocation2 + $0x74] sm:$0xf]
    %v87 = vld [vmem:[#allocation2 + $0x78] sm:$0xf]
    %v88 = vld [vmem:[#allocation2 + $0x7c] sm:$0xf]
    %v89 = vld [vmem:[#allocation2 + $0x80] sm:$0xf]
    %v90 = vld [vmem:[#allocation2 + $0x84] sm:$0xf]
    %v91 = vld [vmem:[#allocation2 + $0x88] sm:$0xf]
    %v92 = vld [vmem:[#allocation2 + $0x8c] sm:$0xf]
    %v93 = vld [vmem:[#allocation2 + $0x90] sm:$0xf]
    %v94 = vld [vmem:[#allocation2 + $0x94] sm:$0xf]
    %v95 = vld [vmem:[#allocation2 + $0x98] sm:$0xf]
    %v96 = vld [vmem:[#allocation2 + $0x9c] sm:$0xf]
    %v97 = vld [vmem:[#allocation2 + $0xa0] sm:$0xf]
    %v98 = vld [vmem:[#allocation2 + $0xa4] sm:$0xf]
    %v99 = vld [vmem:[#allocation2 + $0xa8] sm:$0xf]
    %v100 = vld [vmem:[#allocation2 + $0xac] sm:$0xf]
    %v101 = vld [vmem:[#allocation2 + $0xb0] sm:$0xf]
    %v102 = vld [vmem:[#allocation2 + $0xb4] sm:$0xf]
    %v103 = vld [vmem:[#allocation2 + $0xb8] sm:$0xf]
    %v104 = vld [vmem:[#allocation2 + $0xbc] sm:$0xf]
    %v105 = vld [vmem:[#allocation2 + $0xc0] sm:$0xf]
    %v106 = vld [vmem:[#allocation2 + $0xc4] sm:$0xf]
    %v107 = vld [vmem:[#allocation2 + $0xc8] sm:$0xf]
    %v108 = vld [vmem:[#allocation2 + $0xcc] sm:$0xf]
    %v109 = vld [vmem:[#allocation2 + $0xd0] sm:$0xf]
    %v110 = vld [vmem:[#allocation2 + $0xd4] sm:$0xf]
    %v111 = vld [vmem:[#allocation2 + $0xd8] sm:$0xf]
    %v112 = vld [vmem:[#allocation2 + $0xdc] sm:$0xf]
    %v113 = vld [vmem:[#allocation2 + $0xe0] sm:$0xf]
    %v114 = vld [vmem:[#allocation2 + $0xe4] sm:$0xf]
    %v115 = vld [vmem:[#allocation2 + $0xe8] sm:$0xf]
    %v116 = vld [vmem:[#allocation2 + $0xec] sm:$0xf]
    %v117 = vld [vmem:[#allocation2 + $0xf0] sm:$0xf]
    %v118 = vld [vmem:[#allocation2 + $0xf4] sm:$0xf]
    %v119 = vld [vmem:[#allocation2 + $0xf8] sm:$0xf]
    %v120 = vld [vmem:[#allocation2 + $0xfc] sm:$0xf]
    %v121 = vld [vmem:[#allocation2 + $0x100] sm:$0xf]
    %v122 = vld [vmem:[#allocation2 + $0x104] sm:$0xf]
    %v123 = vld [vmem:[#allocation2 + $0x108] sm:$0xf]
    %v124 = vld [vmem:[#allocation2 + $0x10c] sm:$0xf]
    %v125 = vld [vmem:[#allocation2 + $0x110] sm:$0xf]
    %v126 = vld [vmem:[#allocation2 + $0x114] sm:$0xf]
    %v127 = vld [vmem:[#allocation2 + $0x118] sm:$0xf]
    %v128 = vld [vmem:[#allocation2 + $0x11c] sm:$0xf]
    %v129 = vld [vmem:[#allocation2 + $0x120] sm:$0xf]
    %v130 = vld [vmem:[#allocation2 + $0x124] sm:$0xf]
    %v131 = vld [vmem:[#allocation2 + $0x128] sm:$0xf]
    %v132 = vld [vmem:[#allocation2 + $0x12c] sm:$0xf]
    %v133 = vld [vmem:[#allocation2 + $0x130] sm:$0xf]
    %v134 = vld [vmem:[#allocation2 + $0x134] sm:$0xf]
    %v135 = vld [vmem:[#allocation2 + $0x138] sm:$0xf]
    %v136 = vld [vmem:[#allocation2 + $0x13c] sm:$0xf]
    %v137 = vld [vmem:[#allocation2 + $0x140] sm:$0xf]
    %v138 = vld [vmem:[#allocation2 + $0x144] sm:$0xf]
    %v139 = vld [vmem:[#allocation2 + $0x148] sm:$0xf]
    %v140 = vld [vmem:[#allocation2 + $0x14c] sm:$0xf]
    %v141 = vld [vmem:[#allocation2 + $0x150] sm:$0xf]
    %v142 = vld [vmem:[#allocation2 + $0x154] sm:$0xf]
    %v143 = vld [vmem:[#allocation2 + $0x158] sm:$0xf]
    %v144 = vld [vmem:[#allocation2 + $0x15c] sm:$0xf]
    %v145 = vld [vmem:[#allocation2 + $0x160] sm:$0xf]
    %v146 = vld [vmem:[#allocation2 + $0x164] sm:$0xf]
    %v147 = vld [vmem:[#allocation2 + $0x168] sm:$0xf]
    %v148 = vld [vmem:[#allocation2 + $0x16c] sm:$0xf]
    %v149 = vld [vmem:[#allocation2 + $0x170] sm:$0xf]
    %v150 = vld [vmem:[#allocation2 + $0x174] sm:$0xf]
    %v151 = vld [vmem:[#allocation2 + $0x178] sm:$0xf]
    %v152 = vld [vmem:[#allocation2 + $0x17c] sm:$0xf]
    %v153 = vld [vmem:[#allocation2 + $0x180] sm:$0xf]
    %v154 = vld [vmem:[#allocation2 + $0x184] sm:$0xf]
    %v155 = vld [vmem:[#allocation2 + $0x188] sm:$0xf]
    %v156 = vld [vmem:[#allocation2 + $0x18c] sm:$0xf]
    %v157 = vld [vmem:[#allocation2 + $0x190] sm:$0xf]
    %v158 = vld [vmem:[#allocation2 + $0x194] sm:$0xf]
    %v159 = vld [vmem:[#allocation2 + $0x198] sm:$0xf]
    %v160 = vld [vmem:[#allocation2 + $0x19c] sm:$0xf]
    %v161 = vld [vmem:[#allocation2 + $0x1a0] sm:$0xf]
    %v162 = vld [vmem:[#allocation2 + $0x1a4] sm:$0xf]
    %v163 = vld [vmem:[#allocation2 + $0x1a8] sm:$0xf]
    %v164 = vld [vmem:[#allocation2 + $0x1ac] sm:$0xf]
    %v165 = vld [vmem:[#allocation2 + $0x1b0] sm:$0xf]
    %v166 = vld [vmem:[#allocation2 + $0x1b4] sm:$0xf]
    %v167 = vld [vmem:[#allocation2 + $0x1b8] sm:$0xf]
    %v168 = vld [vmem:[#allocation2 + $0x1bc] sm:$0xf]
    %v169 = vld [vmem:[#allocation2 + $0x1c0] sm:$0xf]
    %v170 = vld [vmem:[#allocation2 + $0x1c4] sm:$0xf]
    %v171 = vld [vmem:[#allocation2 + $0x1c8] sm:$0xf]
    %v172 = vld [vmem:[#allocation2 + $0x1cc] sm:$0xf]
    %v173 = vld [vmem:[#allocation2 + $0x1d0] sm:$0xf]
    %v174 = vld [vmem:[#allocation2 + $0x1d4] sm:$0xf]
    %v175 = vld [vmem:[#allocation2 + $0x1d8] sm:$0xf]
    %v176 = vld [vmem:[#allocation2 + $0x1dc] sm:$0xf]
    %v177 = vld [vmem:[#allocation2 + $0x1e0] sm:$0xf]
    %v178 = vld [vmem:[#allocation2 + $0x1e4] sm:$0xf]
    %v179 = vld [vmem:[#allocation2 + $0x1e8] sm:$0xf]
    %v180 = vld [vmem:[#allocation2 + $0x1ec] sm:$0xf]
    %v181 = vld [vmem:[#allocation2 + $0x1f0] sm:$0xf]
    %v182 = vld [vmem:[#allocation2 + $0x1f4] sm:$0xf]
    %v183 = vld [vmem:[#allocation2 + $0x1f8] sm:$0xf]
    %v184 = vld [vmem:[#allocation2 + $0x1fc] sm:$0xf]
    %v185 = vld [vmem:[%s2] sm:$0x1]
    %v187 = vperm.slane %v185, 0
    %v317 = vunpack.c.l.b16 %v57
    %v318 = vunpack.c.l.b16 %v58
    %v319 = vunpack.c.l.b16 %v59
    %v320 = vunpack.c.l.b16 %v60
    %v321 = vunpack.c.l.b16 %v61
    %v322 = vunpack.c.l.b16 %v62
    %v323 = vunpack.c.l.b16 %v63
    %v324 = vunpack.c.l.b16 %v64
    %v325 = vunpack.c.l.b16 %v65
    %v326 = vunpack.c.l.b16 %v66
    %v327 = vunpack.c.l.b16 %v67
    %v328 = vunpack.c.l.b16 %v68
    %v329 = vunpack.c.l.b16 %v69
    %v330 = vunpack.c.l.b16 %v70
    %v331 = vunpack.c.l.b16 %v71
    %v332 = vunpack.c.l.b16 %v72
    %v333 = vunpack.c.l.b16 %v73
    %v334 = vunpack.c.l.b16 %v74
    %v335 = vunpack.c.l.b16 %v75
    %v336 = vunpack.c.l.b16 %v76
    %v337 = vunpack.c.l.b16 %v77
    %v338 = vunpack.c.l.b16 %v78
    %v339 = vunpack.c.l.b16 %v79
    %v340 = vunpack.c.l.b16 %v80
    %v341 = vunpack.c.l.b16 %v81
    %v342 = vunpack.c.l.b16 %v82
    %v343 = vunpack.c.l.b16 %v83
    %v344 = vunpack.c.l.b16 %v84
    %v345 = vunpack.c.l.b16 %v85
    %v346 = vunpack.c.l.b16 %v86
    %v347 = vunpack.c.l.b16 %v87
    %v348 = vunpack.c.l.b16 %v88
    %v349 = vunpack.c.l.b16 %v89
    %v350 = vunpack.c.l.b16 %v90
    %v351 = vunpack.c.l.b16 %v91
    %v352 = vunpack.c.l.b16 %v92
    %v353 = vunpack.c.l.b16 %v93
    %v354 = vunpack.c.l.b16 %v94
    %v355 = vunpack.c.l.b16 %v95
    %v356 = vunpack.c.l.b16 %v96
    %v357 = vunpack.c.l.b16 %v97
    %v358 = vunpack.c.l.b16 %v98
    %v359 = vunpack.c.l.b16 %v99
    %v360 = vunpack.c.l.b16 %v100
    %v361 = vunpack.c.l.b16 %v101
    %v362 = vunpack.c.l.b16 %v102
    %v363 = vunpack.c.l.b16 %v103
    %v364 = vunpack.c.l.b16 %v104
    %v365 = vunpack.c.l.b16 %v105
    %v366 = vunpack.c.l.b16 %v106
    %v367 = vunpack.c.l.b16 %v107
    %v368 = vunpack.c.l.b16 %v108
    %v369 = vunpack.c.l.b16 %v109
    %v370 = vunpack.c.l.b16 %v110
    %v371 = vunpack.c.l.b16 %v111
    %v372 = vunpack.c.l.b16 %v112
    %v373 = vunpack.c.l.b16 %v113
    %v374 = vunpack.c.l.b16 %v114
    %v375 = vunpack.c.l.b16 %v115
    %v376 = vunpack.c.l.b16 %v116
    %v377 = vunpack.c.l.b16 %v117
    %v378 = vunpack.c.l.b16 %v118
    %v379 = vunpack.c.l.b16 %v119
    %v380 = vunpack.c.l.b16 %v120
    %v381 = vunpack.c.l.b16 %v121
    %v382 = vunpack.c.l.b16 %v122
    %v383 = vunpack.c.l.b16 %v123
    %v384 = vunpack.c.l.b16 %v124
    %v385 = vunpack.c.l.b16 %v125
    %v386 = vunpack.c.l.b16 %v126
    %v387 = vunpack.c.l.b16 %v127
    %v388 = vunpack.c.l.b16 %v128
    %v389 = vunpack.c.l.b16 %v129
    %v390 = vunpack.c.l.b16 %v130
    %v391 = vunpack.c.l.b16 %v131
    %v392 = vunpack.c.l.b16 %v132
    %v393 = vunpack.c.l.b16 %v133
    %v394 = vunpack.c.l.b16 %v134
    %v395 = vunpack.c.l.b16 %v135
    %v396 = vunpack.c.l.b16 %v136
    %v397 = vunpack.c.l.b16 %v137
    %v398 = vunpack.c.l.b16 %v138
    %v399 = vunpack.c.l.b16 %v139
    %v400 = vunpack.c.l.b16 %v140
    %v401 = vunpack.c.l.b16 %v141
    %v402 = vunpack.c.l.b16 %v142
    %v403 = vunpack.c.l.b16 %v143
    %v404 = vunpack.c.l.b16 %v144
    %v405 = vunpack.c.l.b16 %v145
    %v406 = vunpack.c.l.b16 %v146
    %v407 = vunpack.c.l.b16 %v147
    %v408 = vunpack.c.l.b16 %v148
    %v409 = vunpack.c.l.b16 %v149
    %v410 = vunpack.c.l.b16 %v150
    %v411 = vunpack.c.l.b16 %v151
    %v412 = vunpack.c.l.b16 %v152
    %v413 = vunpack.c.l.b16 %v153
    %v414 = vunpack.c.l.b16 %v154
    %v415 = vunpack.c.l.b16 %v155
    %v416 = vunpack.c.l.b16 %v156
    %v417 = vunpack.c.l.b16 %v157
    %v418 = vunpack.c.l.b16 %v158
    %v419 = vunpack.c.l.b16 %v159
    %v420 = vunpack.c.l.b16 %v160
    %v421 = vunpack.c.l.b16 %v161
    %v422 = vunpack.c.l.b16 %v162
    %v423 = vunpack.c.l.b16 %v163
    %v424 = vunpack.c.l.b16 %v164
    %v425 = vunpack.c.l.b16 %v165
    %v426 = vunpack.c.l.b16 %v166
    %v427 = vunpack.c.l.b16 %v167
    %v428 = vunpack.c.l.b16 %v168
    %v429 = vunpack.c.l.b16 %v169
    %v430 = vunpack.c.l.b16 %v170
    %v431 = vunpack.c.l.b16 %v171
    %v432 = vunpack.c.l.b16 %v172
    %v433 = vunpack.c.l.b16 %v173
    %v434 = vunpack.c.l.b16 %v174
    %v435 = vunpack.c.l.b16 %v175
    %v436 = vunpack.c.l.b16 %v176
    %v437 = vunpack.c.l.b16 %v177
    %v438 = vunpack.c.l.b16 %v178
    %v439 = vunpack.c.l.b16 %v179
    %v440 = vunpack.c.l.b16 %v180
    %v441 = vunpack.c.l.b16 %v181
    %v442 = vunpack.c.l.b16 %v182
    %v443 = vunpack.c.l.b16 %v183
    %v444 = vunpack.c.l.b16 %v184
    %v445 = vpack.c.b16 %v318, %v317
    %v446 = vpack.c.b16 %v320, %v319
    %v447 = vpack.c.b16 %v322, %v321
    %v448 = vpack.c.b16 %v324, %v323
    %v449 = vpack.c.b16 %v326, %v325
    %v450 = vpack.c.b16 %v328, %v327
    %v451 = vpack.c.b16 %v330, %v329
    %v452 = vpack.c.b16 %v332, %v331
    %v453 = vpack.c.b16 %v334, %v333
    %v454 = vpack.c.b16 %v336, %v335
    %v455 = vpack.c.b16 %v338, %v337
    %v456 = vpack.c.b16 %v340, %v339
    %v457 = vpack.c.b16 %v342, %v341
    %v458 = vpack.c.b16 %v344, %v343
    %v459 = vpack.c.b16 %v346, %v345
    %v460 = vpack.c.b16 %v348, %v347
    %v461 = vpack.c.b16 %v350, %v349
    %v462 = vpack.c.b16 %v352, %v351
    %v463 = vpack.c.b16 %v354, %v353
    %v464 = vpack.c.b16 %v356, %v355
    %v465 = vpack.c.b16 %v358, %v357
    %v466 = vpack.c.b16 %v360, %v359
    %v467 = vpack.c.b16 %v362, %v361
    %v468 = vpack.c.b16 %v364, %v363
    %v469 = vpack.c.b16 %v366, %v365
    %v470 = vpack.c.b16 %v368, %v367
    %v471 = vpack.c.b16 %v370, %v369
    %v472 = vpack.c.b16 %v372, %v371
    %v473 = vpack.c.b16 %v374, %v373
    %v474 = vpack.c.b16 %v376, %v375
    %v475 = vpack.c.b16 %v378, %v377
    %v476 = vpack.c.b16 %v380, %v379
    %v477 = vpack.c.b16 %v382, %v381
    %v478 = vpack.c.b16 %v384, %v383
    %v479 = vpack.c.b16 %v386, %v385
    %v480 = vpack.c.b16 %v388, %v387
    %v481 = vpack.c.b16 %v390, %v389
    %v482 = vpack.c.b16 %v392, %v391
    %v483 = vpack.c.b16 %v394, %v393
    %v484 = vpack.c.b16 %v396, %v395
    %v485 = vpack.c.b16 %v398, %v397
    %v486 = vpack.c.b16 %v400, %v399
    %v487 = vpack.c.b16 %v402, %v401
    %v488 = vpack.c.b16 %v404, %v403
    %v489 = vpack.c.b16 %v406, %v405
    %v490 = vpack.c.b16 %v408, %v407
    %v491 = vpack.c.b16 %v410, %v409
    %v492 = vpack.c.b16 %v412, %v411
    %v493 = vpack.c.b16 %v414, %v413
    %v494 = vpack.c.b16 %v416, %v415
    %v495 = vpack.c.b16 %v418, %v417
    %v496 = vpack.c.b16 %v420, %v419
    %v497 = vpack.c.b16 %v422, %v421
    %v498 = vpack.c.b16 %v424, %v423
    %v499 = vpack.c.b16 %v426, %v425
    %v500 = vpack.c.b16 %v428, %v427
    %v501 = vpack.c.b16 %v430, %v429
    %v502 = vpack.c.b16 %v432, %v431
    %v503 = vpack.c.b16 %v434, %v433
    %v504 = vpack.c.b16 %v436, %v435
    %v505 = vpack.c.b16 %v438, %v437
    %v506 = vpack.c.b16 %v440, %v439
    %v507 = vpack.c.b16 %v442, %v441
    %v508 = vpack.c.b16 %v444, %v443
    %573 = vmatpush.bf16.msra.mxu0 %v452
    %574 = vmatpush.bf16.msra.mxu0 %v451
    %575 = vmatpush.bf16.msra.mxu0 %v450
    %576 = vmatpush.bf16.msra.mxu0 %v449
    %577 = vmatpush.bf16.msra.mxu0 %v448
    %578 = vmatpush.bf16.msra.mxu0 %v447
    %579 = vmatpush.bf16.msra.mxu0 %v446
    %580 = vmatpush.bf16.msra.mxu0 %v445
    %581 = vmatmul.bf16.gmra.mxu0 %v49
    %v582 = vpop.f32.mrf.mxu0
    %v583 = vadd.f32 %v187, %v582
    %v584 = vpop.f32.mrf.mxu0
    %v585 = vadd.f32 %v187, %v584
    %586 = vdwg.mxu0
    %587 = vmatpush.bf16.msra.mxu0 %v460
    %588 = vmatpush.bf16.msra.mxu0 %v459
    %589 = vmatpush.bf16.msra.mxu0 %v458
    %590 = vmatpush.bf16.msra.mxu0 %v457
    %591 = vmatpush.bf16.msra.mxu0 %v456
    %592 = vmatpush.bf16.msra.mxu0 %v455
    %593 = vmatpush.bf16.msra.mxu0 %v454
    %594 = vmatpush.bf16.msra.mxu0 %v453
    %595 = vmatmul.bf16.gmra.mxu0 %v50
    %v596 = vpop.f32.mrf.mxu0
    %v597 = vadd.f32 %v583, %v596
    %v598 = vpop.f32.mrf.mxu0
    %v599 = vadd.f32 %v585, %v598
    %600 = vdwg.mxu0
    %601 = vmatpush.bf16.msra.mxu0 %v468
    %602 = vmatpush.bf16.msra.mxu0 %v467
    %603 = vmatpush.bf16.msra.mxu0 %v466
    %604 = vmatpush.bf16.msra.mxu0 %v465
    %605 = vmatpush.bf16.msra.mxu0 %v464
    %606 = vmatpush.bf16.msra.mxu0 %v463
    %607 = vmatpush.bf16.msra.mxu0 %v462
    %608 = vmatpush.bf16.msra.mxu0 %v461
    %609 = vmatmul.bf16.gmra.mxu0 %v51
    %v610 = vpop.f32.mrf.mxu0
    %v611 = vadd.f32 %v597, %v610
    %v612 = vpop.f32.mrf.mxu0
    %v613 = vadd.f32 %v599, %v612
    %614 = vdwg.mxu0
    %615 = vmatpush.bf16.msra.mxu0 %v476
    %616 = vmatpush.bf16.msra.mxu0 %v475
    %617 = vmatpush.bf16.msra.mxu0 %v474
    %618 = vmatpush.bf16.msra.mxu0 %v473
    %619 = vmatpush.bf16.msra.mxu0 %v472
    %620 = vmatpush.bf16.msra.mxu0 %v471
    %621 = vmatpush.bf16.msra.mxu0 %v470
    %622 = vmatpush.bf16.msra.mxu0 %v469
    %623 = vmatmul.bf16.gmra.mxu0 %v52
    %v624 = vpop.f32.mrf.mxu0
    %v625 = vadd.f32 %v611, %v624
    %v626 = vpop.f32.mrf.mxu0
    %v627 = vadd.f32 %v613, %v626
    %628 = vdwg.mxu0
    %629 = vmatpush.bf16.msra.mxu0 %v484
    %630 = vmatpush.bf16.msra.mxu0 %v483
    %631 = vmatpush.bf16.msra.mxu0 %v482
    %632 = vmatpush.bf16.msra.mxu0 %v481
    %633 = vmatpush.bf16.msra.mxu0 %v480
    %634 = vmatpush.bf16.msra.mxu0 %v479
    %635 = vmatpush.bf16.msra.mxu0 %v478
    %636 = vmatpush.bf16.msra.mxu0 %v477
    %637 = vmatmul.bf16.gmra.mxu0 %v53
    %v638 = vpop.f32.mrf.mxu0
    %v639 = vadd.f32 %v625, %v638
    %v640 = vpop.f32.mrf.mxu0
    %v641 = vadd.f32 %v627, %v640
    %642 = vdwg.mxu0
    %643 = vmatpush.bf16.msra.mxu0 %v492
    %644 = vmatpush.bf16.msra.mxu0 %v491
    %645 = vmatpush.bf16.msra.mxu0 %v490
    %646 = vmatpush.bf16.msra.mxu0 %v489
    %647 = vmatpush.bf16.msra.mxu0 %v488
    %648 = vmatpush.bf16.msra.mxu0 %v487
    %649 = vmatpush.bf16.msra.mxu0 %v486
    %650 = vmatpush.bf16.msra.mxu0 %v485
    %651 = vmatmul.bf16.gmra.mxu0 %v54
    %v652 = vpop.f32.mrf.mxu0
    %v653 = vadd.f32 %v639, %v652
    %v654 = vpop.f32.mrf.mxu0
    %v655 = vadd.f32 %v641, %v654
    %656 = vdwg.mxu0
    %657 = vmatpush.bf16.msra.mxu0 %v500
    %658 = vmatpush.bf16.msra.mxu0 %v499
    %659 = vmatpush.bf16.msra.mxu0 %v498
    %660 = vmatpush.bf16.msra.mxu0 %v497
    %661 = vmatpush.bf16.msra.mxu0 %v496
    %662 = vmatpush.bf16.msra.mxu0 %v495
    %663 = vmatpush.bf16.msra.mxu0 %v494
    %664 = vmatpush.bf16.msra.mxu0 %v493
    %665 = vmatmul.bf16.gmra.mxu0 %v55
    %v666 = vpop.f32.mrf.mxu0
    %v667 = vadd.f32 %v653, %v666
    %v668 = vpop.f32.mrf.mxu0
    %v669 = vadd.f32 %v655, %v668
    %670 = vdwg.mxu0
    %671 = vmatpush.bf16.msra.mxu0 %v508
    %672 = vmatpush.bf16.msra.mxu0 %v507
    %673 = vmatpush.bf16.msra.mxu0 %v506
    %674 = vmatpush.bf16.msra.mxu0 %v505
    %675 = vmatpush.bf16.msra.mxu0 %v504
    %676 = vmatpush.bf16.msra.mxu0 %v503
    %677 = vmatpush.bf16.msra.mxu0 %v502
    %678 = vmatpush.bf16.msra.mxu0 %v501
    %679 = vmatmul.bf16.gmra.mxu0 %v56
    %v680 = vpop.f32.mrf.mxu0
    %v681 = vadd.f32 %v667, %v680
    %v682 = vpop.f32.mrf.mxu0
    %v683 = vadd.f32 %v669, %v682
    %684 = vdwg.mxu0
    %v685 = vmax.f32 %v681, 0.0
    %v686 = vmax.f32 %v683, 0.0
    %v687 = vpack.c.bf16 %v686, %v685
    %v688 = vld [vmem:[%s3] sm:$0xf]
    %v689 = vld [vmem:[%s3 + $0x4] sm:$0xf]
    %v690 = vld [vmem:[%s3 + $0x8] sm:$0xf]
    %v691 = vld [vmem:[%s3 + $0xc] sm:$0xf]
    %v692 = vld [vmem:[%s3 + $0x10] sm:$0xf]
    %v693 = vld [vmem:[%s3 + $0x14] sm:$0xf]
    %v694 = vld [vmem:[%s3 + $0x18] sm:$0xf]
    %v695 = vld [vmem:[%s3 + $0x1c] sm:$0xf]
    %v696 = vld [vmem:[%s3 + $0x20] sm:$0xf]
    %v697 = vld [vmem:[%s3 + $0x24] sm:$0xf]
    %v698 = vld [vmem:[%s3 + $0x28] sm:$0xf]
    %v699 = vld [vmem:[%s3 + $0x2c] sm:$0xf]
    %v700 = vld [vmem:[%s3 + $0x30] sm:$0xf]
    %v701 = vld [vmem:[%s3 + $0x34] sm:$0xf]
    %v702 = vld [vmem:[%s3 + $0x38] sm:$0xf]
    %v703 = vld [vmem:[%s3 + $0x3c] sm:$0xf]
    %v720 = vunpack.c.l.b16 %v688
    %v721 = vunpack.c.l.b16 %v689
    %v722 = vunpack.c.l.b16 %v690
    %v723 = vunpack.c.l.b16 %v691
    %v724 = vunpack.c.l.b16 %v692
    %v725 = vunpack.c.l.b16 %v693
    %v726 = vunpack.c.l.b16 %v694
    %v727 = vunpack.c.l.b16 %v695
    %v728 = vunpack.c.l.b16 %v696
    %v729 = vunpack.c.l.b16 %v697
    %v730 = vunpack.c.l.b16 %v698
    %v731 = vunpack.c.l.b16 %v699
    %v732 = vunpack.c.l.b16 %v700
    %v733 = vunpack.c.l.b16 %v701
    %v734 = vunpack.c.l.b16 %v702
    %v735 = vunpack.c.l.b16 %v703
    %v736 = vpack.c.b16 %v721, %v720
    %v737 = vpack.c.b16 %v723, %v722
    %v738 = vpack.c.b16 %v725, %v724
    %v739 = vpack.c.b16 %v727, %v726
    %v740 = vpack.c.b16 %v729, %v728
    %v741 = vpack.c.b16 %v731, %v730
    %v742 = vpack.c.b16 %v733, %v732
    %v743 = vpack.c.b16 %v735, %v734
    %752 = vmatpush.bf16.msra.mxu0 %v743
    %753 = vmatpush.bf16.msra.mxu0 %v742
    %754 = vmatpush.bf16.msra.mxu0 %v741
    %755 = vmatpush.bf16.msra.mxu0 %v740
    %756 = vmatpush.bf16.msra.mxu0 %v739
    %757 = vmatpush.bf16.msra.mxu0 %v738
    %758 = vmatpush.bf16.msra.mxu0 %v737
    %759 = vmatpush.bf16.msra.mxu0 %v736
    %760 = vmatmul.bf16.gmra.mxu0 %v687
    %v761 = vpop.f32.mrf.mxu0
    %v762 = vadd.f32 0.0, %v761
    %v763 = vpop.f32.mrf.mxu0
    %v764 = vadd.f32 0.0, %v763
    %765 = vdwg.mxu0
    %v766 = vlaneseq
    %v767 = vand.u32 %v766, 127
    %vm768 = vcmp.lt.s32.totalorder %v767, 15
    %v769 = vsel %vm768, %v762, -inf
    %v770 = vsel %vm768, %v764, -inf
    %771 = vmax.xlane.f32.xlu0 %v769
    %v772 = vpop.xlane.xlu0 %771
    %773 = vmax.xlane.f32.xlu0 %v770
    %v774 = vpop.xlane.xlu0 %773
    %v775 = vsub.f32 %v769, %v772
    %v776 = vsub.f32 %v770, %v774
    %v777 = vmul.f32 %v775, 1.442695
    %v778 = vpow.pop %v777
    %v779 = vmul.f32 %v776, 1.442695
    %v780 = vpow.pop %v779
    %781 = vadd.xlane.f32.xlu0 %v778
    %v782 = vpop.xlane.xlu0 %781
    %783 = vadd.xlane.f32.xlu0 %v780
    %v784 = vpop.xlane.xlu0 %783
    %v785 = vlog2.pop %v782
    %v786 = vmul.f32 %v785, 0.6931472
    %v787 = vlog2.pop %v784
    %v788 = vmul.f32 %v787, 0.6931472
    %v789 = vsub.f32 %v775, %v786
    %v790 = vsub.f32 %v776, %v788
    %v791 = vsel %vm768, %v789, %v762
    %v792 = vsel %vm768, %v790, %v764
    %793 = vst [vmem:[%s4] sm:$0xff] %v791
    %794 = vst [vmem:[%s4 + $0x8] sm:$0xff] %v792
    // Predicated region
    $region22: #{categorical_policy_forward.1} parent=1 // pred_check
      _
    $region23: #{categorical_policy_forward.1} parent=1 // pred_check_branch
      %796 = sbr.rel (0) target = $region25
    $region24: #{categorical_policy_forward.1} parent=1 // pred_region
      _
    $region25: #{categorical_policy_forward.1} parent=1 // pred_fallthru
      _
    // Predicated region
    $region26: #{categorical_policy_forward.1} parent=1 // pred_check
      _
    $region27: #{categorical_policy_forward.1} parent=1 // pred_check_branch
      %798 = sbr.rel (0) target = $region29
    $region28: #{categorical_policy_forward.1} parent=1 // pred_region
      _
    $region29: #{categorical_policy_forward.1} parent=1 // pred_fallthru
      _
    %799 = vsyncpa [#allocation3], 1

</llo_original>
